<compile_context>
chip_gen: v7x
topology: tpu7x:2x2x1
jax: 0.10.0
libtpu: 0.0.40
codegen_flags: <defaults>
</compile_context>

<pallas_src>
import functools

import jax
import jax.numpy as jnp
from jax.experimental import pallas as pl
from jax.experimental.pallas import tpu as pltpu


def _pair_generation_kernel(x_ref, out_ref, *, tile_i, seq, feat):
    # x_ref:   (1, seq, feat)              all rows of this batch element
    # out_ref: (1, tile_i, seq, 2*feat)    rows [i0, i0+tile_i) of the pair grid
    x = x_ref[0]                                              # (seq, feat)

    i0 = pl.multiple_of(pl.program_id(1) * tile_i, tile_i)
    rows_i = x_ref[0, pl.ds(i0, tile_i), :]                   # (tile_i, feat)

    # output[b, i, j, :feat] = text[b, j]   (hidden_1: varies over j)
    h1 = jnp.broadcast_to(x[None, :, :], (tile_i, seq, feat))
    # output[b, i, j, feat:] = text[b, i]   (hidden_2: varies over i)
    h2 = jnp.broadcast_to(rows_i[:, None, :], (tile_i, seq, feat))

    # Two static lane-slice stores — avoids materializing a concat copy in VMEM.
    out_ref[0, :, :, 0:feat] = h1.astype(out_ref.dtype)
    out_ref[0, :, :, feat:2 * feat] = h2.astype(out_ref.dtype)


def pair_generation(text, *, block_rows=None):
    """text: (bs, seq, feat) -> (bs, seq, seq, 2*feat)."""
    bs, seq, feat = text.shape
    out_feat = 2 * feat
    itemsize = jnp.dtype(text.dtype).itemsize

    if block_rows is None:
        # Size the i-tile so one output block is ~4 MiB (double-buffered by the
        # pipeline => ~8 MiB), safe on v7x's 64 MiB VMEM while still big enough
        # to amortize the ~600-cycle per-grid-step overhead.
        row_bytes = seq * out_feat * itemsize
        block_rows = max(1, min(seq, (4 * 1024 * 1024) // max(1, row_bytes)))
    # Make the tile evenly divide seq (keeps index maps trivial).
    while seq % block_rows:
        block_rows -= 1
    tile_i = block_rows

    grid = (bs, seq // tile_i)

    kernel = functools.partial(
        _pair_generation_kernel, tile_i=tile_i, seq=seq, feat=feat)

    bytes_in = bs * (seq // tile_i) * seq * feat * itemsize   # x re-read per i-tile
    bytes_out = bs * seq * seq * out_feat * itemsize
    cost = pl.CostEstimate(
        flops=0, transcendentals=0, bytes_accessed=bytes_in + bytes_out)

    out = pl.pallas_call(
        kernel,
        out_shape=jax.ShapeDtypeStruct((bs, seq, seq, out_feat), text.dtype),
        grid_spec=pltpu.PrefetchScalarGridSpec(
            num_scalar_prefetch=0,
            grid=grid,
            in_specs=[
                # Full (seq, feat) slab of the current batch element.
                pl.BlockSpec((1, seq, feat), lambda b, i: (b, 0, 0)),
            ],
            out_specs=pl.BlockSpec(
                (1, tile_i, seq, out_feat), lambda b, i: (b, i, 0, 0)),
        ),
        compiler_params=pltpu.CompilerParams(
            dimension_semantics=("parallel", "parallel"),
            vmem_limit_bytes=32 * 1024 * 1024,
        ),
        cost_estimate=cost,
    )(text)

    return out


def _reference(text):
    bs, seq, feat = text.shape
    h1 = jnp.broadcast_to(text[:, None, :, :], (bs, seq, seq, feat))
    h2 = jnp.broadcast_to(text[:, :, None, :], (bs, seq, seq, feat))
    return jnp.concatenate([h1, h2], axis=-1)


if __name__ == "__main__":
    bs, seq, feat = 2, 8, 32   # text: (batch, seq, features)

    key = jax.random.PRNGKey(0)
    text = jax.random.normal(key, (bs, seq, feat), jnp.float32)
    # NOTE: PairGeneration0.weight / .bias are never used in forward, so no
    # parameters are needed here.

    out = jax.jit(pair_generation)(text)
    jax.block_until_ready(out)

    ref = _reference(text)
    assert out.shape == (bs, seq, seq, 2 * feat)
    assert jnp.array_equal(out, ref)   # pure data movement — must match exactly

    print("KERNEL_OK")
</pallas_src>

<mosaic_0001>
module attributes {stable_mosaic.version = 11 : i64} {
  func.func @_pair_generation_kernel(%arg0: i32, %arg1: i32, %arg2: memref<1x8x32xf32, #tpu.memory_space<vmem>>, %arg3: memref<1x8x8x64xf32, #tpu.memory_space<vmem>>) attributes {dimension_semantics = [#tpu.dimension_semantics<parallel>, #tpu.dimension_semantics<parallel>], iteration_bounds = array<i64: 2, 1>, scalar_prefetch = 0 : i64, scratch_operands = 0 : i64, tpu.core_type = #tpu.core_type<tc>, window_params = [{transform_indices = @transform_0, window_bounds = array<i64: 1, 8, 32>}, {transform_indices = @transform_1, window_bounds = array<i64: 1, 8, 8, 64>}]} {
    %c0 = arith.constant 0 : index
    %c0_0 = arith.constant 0 : index
    %c0_1 = arith.constant 0 : index
    %0 = vector.load %arg2[%c0, %c0_0, %c0_1] : memref<1x8x32xf32, #tpu.memory_space<vmem>>, vector<1x8x32xf32>
    %1 = vector.shape_cast %0 : vector<1x8x32xf32> to vector<8x32xf32>
    %c8_i32 = arith.constant 8 : i32
    %2 = arith.muli %arg1, %c8_i32 : i32
    %3 = tpu.assume_multiple %2, 8 : i32
    %c0_2 = arith.constant 0 : index
    %4 = arith.index_cast %3 : i32 to index
    %c0_3 = arith.constant 0 : index
    %5 = vector.load %arg2[%c0_2, %4, %c0_3] : memref<1x8x32xf32, #tpu.memory_space<vmem>>, vector<1x8x32xf32>
    %6 = vector.shape_cast %5 : vector<1x8x32xf32> to vector<8x32xf32>
    %7 = vector.shape_cast %1 : vector<8x32xf32> to vector<1x8x32xf32>
    %8 = vector.shape_cast %7 : vector<1x8x32xf32> to vector<1x8x32xf32>
    %9 = vector.broadcast %8 : vector<1x8x32xf32> to vector<8x8x32xf32>
    %10 = vector.shape_cast %6 : vector<8x32xf32> to vector<8x1x32xf32>
    %11 = vector.shape_cast %10 : vector<8x1x32xf32> to vector<8x1x32xf32>
    %12 = vector.broadcast %11 : vector<8x1x32xf32> to vector<8x8x32xf32>
    %c0_4 = arith.constant 0 : index
    %c0_5 = arith.constant 0 : index
    %c0_6 = arith.constant 0 : index
    %c0_7 = arith.constant 0 : index
    %13 = vector.load %arg3[%c0_4, %c0_5, %c0_6, %c0_7] : memref<1x8x8x64xf32, #tpu.memory_space<vmem>>, vector<1x8x8x32xf32>
    %14 = vector.shape_cast %13 : vector<1x8x8x32xf32> to vector<8x8x32xf32>
    %15 = vector.shape_cast %9 : vector<8x8x32xf32> to vector<1x8x8x32xf32>
    tpu.vector_store %arg3[%c0_4, %c0_5, %c0_6, %c0_7], %15 {strides = array<i32>} : memref<1x8x8x64xf32, #tpu.memory_space<vmem>>, vector<1x8x8x32xf32>,
    %c0_8 = arith.constant 0 : index
    %c0_9 = arith.constant 0 : index
    %c0_10 = arith.constant 0 : index
    %c32 = arith.constant 32 : index
    %16 = vector.load %arg3[%c0_8, %c0_9, %c0_10, %c32] : memref<1x8x8x64xf32, #tpu.memory_space<vmem>>, vector<1x8x8x32xf32>
    %17 = vector.shape_cast %16 : vector<1x8x8x32xf32> to vector<8x8x32xf32>
    %18 = vector.shape_cast %12 : vector<8x8x32xf32> to vector<1x8x8x32xf32>
    tpu.vector_store %arg3[%c0_8, %c0_9, %c0_10, %c32], %18 {strides = array<i32>} : memref<1x8x8x64xf32, #tpu.memory_space<vmem>>, vector<1x8x8x32xf32>,
    return
  }
  func.func @transform_0(%arg0: i32, %arg1: i32) -> (i32, i32, i32) {
    %c0_i32 = arith.constant 0 : i32
    %c0_i32_0 = arith.constant 0 : i32
    %c0_i32_1 = arith.constant 0 : i32
    return %arg0, %c0_i32, %c0_i32_0 : i32, i32, i32
  }
  func.func @transform_1(%arg0: i32, %arg1: i32) -> (i32, i32, i32, i32) {
    %c0_i32 = arith.constant 0 : i32
    %c0_i32_0 = arith.constant 0 : i32
    %c0_i32_1 = arith.constant 0 : i32
    return %arg0, %arg1, %c0_i32, %c0_i32_0 : i32, i32, i32, i32
  }
}

</mosaic_0001>

<llo_original>
// kernel: pair_generation.1
$region0: #{pair_generation.1}
  #allocation0 [shape = 'u32[]', space=smem, size = 0x4, offset = 0x4, fixed_abs, tag = 'smem constant byte address 0x4 - core index']
  #allocation1 [shape = 'u32[144,128]{1,0:T(1,128)}', space=vmem, size = 0x12000, scoped, tag = 'internal scratch']
  %s0 = inlined_call_operand.hbm [shape: f32[2,8,32], index: 0, kind: input, shape index: {}]
  %s1 = inlined_call_operand.hbm [shape: f32[2,8,8,64], index: 1, kind: output, shape index: {}]
  %s2 = sld [smem:[#allocation0]]
  $region41: #{pair_generation.1} parent=0
    _
  %s4 = ssub.s32 1, %s2
  %s5 = scalar_select 0, %s4, %s2
  $region1: #{pair_generation.1} parent=0
    #allocation2 [shape = 'u8[8192]{0}', space=vmem, size = 0x2000, scoped, tag = 'input window, operand 0']
    #allocation3 [shape = 's32[2]{0}', space=sflag, size = 0x8, scoped, tag = 'scoped memory for pair_generation.1']
    #allocation4 [shape = 's32[2]{0}', space=sflag, size = 0x8, scoped, tag = 'scoped memory for pair_generation.1']
    #allocation5 [shape = 'u8[65536]{0}', space=vmem, size = 0x10000, scoped, tag = 'output window, operand 0']
    %6 = vsyncpa [#allocation3], 0
    %s7 = scalar_lea.sflag [#allocation3], 1
    %8 = vsyncpa %s7, 0
    %9 = vsyncpa [#allocation4], 0
    %s10 = scalar_lea.sflag [#allocation4], 1
    %11 = vsyncpa %s10, 0
    loop: start=0, step=1, limit=4
    $region2: #{pair_generation.1} parent=1 // loop_pre_header
      _
    $region3: #{pair_generation.1} parent=1 // loop_header
      %s13 = sphi 0, %s17
      %p14 = scmp.ge.s32.totalorder %s13, 4
      %s20 = sphi 0, %s32
      %s21 = sphi 0, %s28
      %s22 = sphi 0, %s20
      %s23 = sphi 0, %s21
      %s24 = sphi 0, %s22
      %s25 = sphi 0, %s23
      %s35 = sphi 0, %s37
      %s38 = sphi 0, %s35
      %s39 = sphi 0, %s38
      %s55 = sphi 0, %s39
      %s63 = sphi 0, %s65
      %s66 = sphi 0, %s63
      %s67 = sphi 0, %s66
      %s83 = sphi 0, %s67
    $region4: #{pair_generation.1} parent=1 // loop_header_branch
      %16 = sbr.rel (%p14) target = $region8
    $region5: #{pair_generation.1} parent=1 // loop_body
      %s18 = ssub.s32 %s13, 1
      %s19 = ssub.s32 %s13, 2
      %s26 = sadd.s32 1, %s21
      %p27 = scmp.ge.s32.totalorder %s26, 1
      %s28 = scalar_select %p27, 0, %s26
      %s29 = sadd.s32 1, %s20
      %s30 = scalar_select %p27, %s29, %s20
      %p31 = scmp.ge.s32.totalorder %s30, 2
      %s32 = scalar_select %p31, 0, %s30
      %s33 = ssub.s32 %s20, %s32
      %p34 = scmp.eq.s32.totalorder %s33, 0
      %s36 = sadd.s32 %s35, 1
      %s37 = scalar_select %p34, %s35, %s36
      %p40 = pneg %p34
      %p41 = scmp.eq.s32.totalorder %s13, 1
      %p42 = por %p40, %p41
      %p43 = scmp.ne.s32.totalorder %s35, %s38
      %p44 = scmp.eq.s32.totalorder %s13, 0
      %p45 = por %p43, %p44
      %p46 = scmp.ne.s32.totalorder %s35, %s38
      %p47 = scmp.eq.s32.totalorder %s18, 1
      %p48 = por %p46, %p47
      %p49 = scmp.ne.s32.totalorder %s38, %s39
      %p50 = scmp.eq.s32.totalorder %s18, 0
      %p51 = por %p49, %p50
      %p52 = scmp.ne.s32.totalorder %s38, %s39
      %p53 = scmp.eq.s32.totalorder %s19, 1
      %p54 = por %p52, %p53
      %p56 = scmp.ne.s32.totalorder %s39, %s55
      %p57 = scmp.eq.s32.totalorder %s19, 0
      %p58 = por %p56, %p57
      %s59 = ssub.s32 %s20, %s32
      %s60 = ssub.s32 %s21, %s28
      %s61 = sor.u32 %s59, %s60
      %p62 = scmp.eq.s32.totalorder %s61, 0
      %s64 = sadd.s32 %s63, 1
      %s65 = scalar_select %p62, %s63, %s64
      %p68 = pneg %p62
      %p69 = scmp.eq.s32.totalorder %s13, 1
      %p70 = por %p68, %p69
      %p71 = scmp.ne.s32.totalorder %s63, %s66
      %p72 = scmp.eq.s32.totalorder %s13, 0
      %p73 = por %p71, %p72
      %p74 = scmp.ne.s32.totalorder %s63, %s66
      %p75 = scmp.eq.s32.totalorder %s18, 1
      %p76 = por %p74, %p75
      %p77 = scmp.ne.s32.totalorder %s66, %s67
      %p78 = scmp.eq.s32.totalorder %s18, 0
      %p79 = por %p77, %p78
      %p80 = scmp.ne.s32.totalorder %s66, %s67
      %p81 = scmp.eq.s32.totalorder %s19, 1
      %p82 = por %p80, %p81
      %p84 = scmp.ne.s32.totalorder %s67, %s83
      %p85 = scmp.eq.s32.totalorder %s19, 0
      %p86 = por %p84, %p85
      %p87 = scmp.le.s32.totalorder 1, %s13
      %p88 = scmp.lt.s32.totalorder %s13, 3
      %p89 = pnand %p87, %p88
      %p90 = pneg %p89
      // Predicated region
      $region9: #{pair_generation.1} parent=5 // pred_check
        _
      $region10: #{pair_generation.1} parent=5 // pred_check_branch
        %92 = sbr.rel (%p89) target = $region12
      $region11: #{pair_generation.1} parent=5 // pred_region
        %s93 = ssub.s32 %s13, 1
      $region12: #{pair_generation.1} parent=5 // pred_fallthru
        _
      %p94 = scmp.lt.s32.totalorder %s13, 2
      // Predicated region
      $region13: #{pair_generation.1} parent=5 // pred_check
        %p95 = pneg %p94
      $region14: #{pair_generation.1} parent=5 // pred_check_branch
        %97 = sbr.rel (%p95) target = $region16
      $region15: #{pair_generation.1} parent=5 // pred_region
        // Predicated region
        $region17: #{pair_generation.1} parent=15 // pred_check
          %p98 = pneg %p45
        $region18: #{pair_generation.1} parent=15 // pred_check_branch
          %100 = sbr.rel (%p98) target = $region20
        $region19: #{pair_generation.1} parent=15 // pred_region
          %s101 = sand.u32 %s35, 1
          %s102 = scalar_lea.sflag [#allocation3], %s101
          %s103 = sand.u32 %s35, 1
          %s104 = smul.addr %s103, 8
          %s105 = scalar_lea.vmem [#allocation2], %s104
          %s107 = ssub.s32 128, 128
          %108 = vsyncadd %s102, %s107
          %s109 = smul.addr %s20, 128
          %s110 = scalar_lea.hbm %s0, %s109
          %s112 = sshll.u32 %s105, 4
          %s113 = int_to_ptr.vmem [resolvable:$true] %s112
          %115 = dma.hbm_to_vmem [thread:$0]  %s110, 128, %s113, %s102
        $region20: #{pair_generation.1} parent=15 // pred_fallthru
          _
      $region16: #{pair_generation.1} parent=5 // pred_fallthru
        _
      %p116 = scmp.le.s32.totalorder 1, %s13
      %p117 = scmp.lt.s32.totalorder %s13, 3
      %p118 = pnand %p116, %p117
      %p119 = pneg %p118
      // Predicated region
      $region21: #{pair_generation.1} parent=5 // pred_check
        _
      $region22: #{pair_generation.1} parent=5 // pred_check_branch
        %121 = sbr.rel (%p118) target = $region24
      $region23: #{pair_generation.1} parent=5 // pred_region
        %s122 = ssub.s32 %s13, 1
        %s123 = sand.u32 %s38, 1
        %s124 = scalar_lea.sflag [#allocation3], %s123
        %s125 = sand.u32 %s38, 1
        %s126 = smul.addr %s125, 8
        %s127 = scalar_lea.vmem [#allocation2], %s126
        // Predicated region
        $region25: #{pair_generation.1} parent=23 // pred_check
          %p128 = pneg %p51
        $region26: #{pair_generation.1} parent=23 // pred_check_branch
          %130 = sbr.rel (%p128) target = $region28
        $region27: #{pair_generation.1} parent=23 // pred_region
          %131 = dma.done %s124, 128
        $region28: #{pair_generation.1} parent=23 // pred_fallthru
          _
        %s132 = sand.u32 %s38, 1
        %s133 = scalar_lea.sflag [#allocation3], %s132
        %s134 = sand.u32 %s38, 1
        %s135 = smul.addr %s134, 8
        %s136 = scalar_lea.vmem [#allocation2], %s135
        %p137 = pneg %p51
        %p138 = pneg %p48
        %p139 = pneg %p79
        %p140 = pneg %p76
        %s141 = sand.u32 %s66, 1
        %s142 = scalar_lea.sflag [#allocation4], %s141
        %s143 = sand.u32 %s66, 1
        %s144 = smul.addr %s143, 64
        %s145 = scalar_lea.vmem [#allocation5], %s144
        %s146 = smul.u32 8, %s23
        %v147 = vld [vmem:[%s127] sm:$0xff]
        %s148 = smul.u32 %s23, 8
        %s149 = scalar_lea.vmem %s127, %s148 [#allocation2]
        %v150 = vld [vmem:[%s149] sm:$0xff]
        %vm151 = vcmask 261120
        %152 = vst.msk [vmem:[%s145] sm:$0xff] %vm151, %v147
        %153 = vst.msk [vmem:[%s145 + $0x8] sm:$0xff] %vm151, %v147
        %154 = vst.msk [vmem:[%s145 + $0x10] sm:$0xff] %vm151, %v147
        %155 = vst.msk [vmem:[%s145 + $0x18] sm:$0xff] %vm151, %v147
        %156 = vst.msk [vmem:[%s145 + $0x20] sm:$0xff] %vm151, %v147
        %157 = vst.msk [vmem:[%s145 + $0x28] sm:$0xff] %vm151, %v147
        %158 = vst.msk [vmem:[%s145 + $0x30] sm:$0xff] %vm151, %v147
        %159 = vst.msk [vmem:[%s145 + $0x38] sm:$0xff] %vm151, %v147
        %v161 = vcombine.high %v150, %v150
        %v163 = vunpack.c.l.s4 1966171168
        %v164 = vunpack.c.0.s8 %v163
        %v165 = vlaneseq
        %v166 = vshrl.u32 %v165, 7
        %v167 = vsub.s32 %v164, %v166
        %v168 = vrot.slane %v150, %v167
        %v170 = vunpack.c.l.s4 1966171168
        %v171 = vunpack.c.0.s8 %v170
        %v172 = vlaneseq
        %v173 = vshrl.u32 %v172, 7
        %v174 = vsub.s32 %v171, %v173
        %v175 = vrot.slane %v161, %v174
        %v176 = vcombine.high %v168, %v168
        %v177 = vcombine.high %v175, %v175
        %v179 = vunpack.c.l.s4 1966171168
        %v180 = vunpack.c.0.s8 %v179
        %v181 = vlaneseq
        %v182 = vshrl.u32 %v181, 7
        %v183 = vsub.s32 %v180, %v182
        %v184 = vrot.slane %v168, %v183
        %v186 = vunpack.c.l.s4 1966171168
        %v187 = vunpack.c.0.s8 %v186
        %v188 = vlaneseq
        %v189 = vshrl.u32 %v188, 7
        %v190 = vsub.s32 %v187, %v189
        %v191 = vrot.slane %v175, %v190
        %v193 = vunpack.c.l.s4 1966171168
        %v194 = vunpack.c.0.s8 %v193
        %v195 = vlaneseq
        %v196 = vshrl.u32 %v195, 7
        %v197 = vsub.s32 %v194, %v196
        %v198 = vrot.slane %v176, %v197
        %v200 = vunpack.c.l.s4 1966171168
        %v201 = vunpack.c.0.s8 %v200
        %v202 = vlaneseq
        %v203 = vshrl.u32 %v202, 7
        %v204 = vsub.s32 %v201, %v203
        %v205 = vrot.slane %v177, %v204
        %v206 = vcombine.high %v184, %v184
        %v207 = vcombine.high %v191, %v191
        %v208 = vcombine.high %v198, %v198
        %v209 = vcombine.high %v205, %v205
        %v210 = vlaneseq
        %v211 = vshrl.u32 %v210, 7
        %v212 = vsub.s32 0, %v211
        %v213 = vrot.slane %v184, %v212
        %v214 = vlaneseq
        %v215 = vshrl.u32 %v214, 7
        %v216 = vsub.s32 0, %v215
        %v217 = vrot.slane %v198, %v216
        %v218 = vlaneseq
        %v219 = vshrl.u32 %v218, 7
        %v220 = vsub.s32 0, %v219
        %v221 = vrot.slane %v206, %v220
        %v222 = vlaneseq
        %v223 = vshrl.u32 %v222, 7
        %v224 = vsub.s32 0, %v223
        %v225 = vrot.slane %v208, %v224
        %v226 = vlaneseq
        %v227 = vshrl.u32 %v226, 7
        %v228 = vsub.s32 0, %v227
        %v229 = vrot.slane %v191, %v228
        %v230 = vlaneseq
        %v231 = vshrl.u32 %v230, 7
        %v232 = vsub.s32 0, %v231
        %v233 = vrot.slane %v205, %v232
        %v234 = vlaneseq
        %v235 = vshrl.u32 %v234, 7
        %v236 = vsub.s32 0, %v235
        %v237 = vrot.slane %v207, %v236
        %v238 = vlaneseq
        %v239 = vshrl.u32 %v238, 7
        %v240 = vsub.s32 0, %v239
        %v241 = vrot.slane %v209, %v240
        %242 = vrot.lane.b32.xlu0 %v213, 32
        %v243 = vpop.permute.xlu0 %242
        %244 = vrot.lane.b32.xlu0 %v217, 32
        %v245 = vpop.permute.xlu0 %244
        %246 = vrot.lane.b32.xlu0 %v221, 32
        %v247 = vpop.permute.xlu0 %246
        %248 = vrot.lane.b32.xlu0 %v225, 32
        %v249 = vpop.permute.xlu0 %248
        %250 = vrot.lane.b32.xlu0 %v229, 32
        %v251 = vpop.permute.xlu0 %250
        %252 = vrot.lane.b32.xlu0 %v233, 32
        %v253 = vpop.permute.xlu0 %252
        %254 = vrot.lane.b32.xlu0 %v237, 32
        %v255 = vpop.permute.xlu0 %254
        %256 = vrot.lane.b32.xlu0 %v241, 32
        %v257 = vpop.permute.xlu0 %256
        %vm266 = vcmask 523520
        %267 = vst.msk [vmem:[%s145] sm:$0xff] %vm266, %v243
        %268 = vst.msk [vmem:[%s145 + $0x8] sm:$0xff] %vm266, %v245
        %269 = vst.msk [vmem:[%s145 + $0x10] sm:$0xff] %vm266, %v247
        %270 = vst.msk [vmem:[%s145 + $0x18] sm:$0xff] %vm266, %v249
        %271 = vst.msk [vmem:[%s145 + $0x20] sm:$0xff] %vm266, %v251
        %272 = vst.msk [vmem:[%s145 + $0x28] sm:$0xff] %vm266, %v253
        %273 = vst.msk [vmem:[%s145 + $0x30] sm:$0xff] %vm266, %v255
        %274 = vst.msk [vmem:[%s145 + $0x38] sm:$0xff] %vm266, %v257
        %s275 = sand.u32 %s66, 1
        %s276 = scalar_lea.sflag [#allocation4], %s275
        %s277 = sand.u32 %s66, 1
        %s278 = smul.addr %s277, 64
        %s279 = scalar_lea.vmem [#allocation5], %s278
        // Predicated region
        $region29: #{pair_generation.1} parent=23 // pred_check
          %p280 = pneg %p76
        $region30: #{pair_generation.1} parent=23 // pred_check_branch
          %282 = sbr.rel (%p280) target = $region32
        $region31: #{pair_generation.1} parent=23 // pred_region
          %s283 = smul.u32 8, %s23
          %s285 = ssub.s32 1024, 1024
          %286 = vsyncadd %s276, %s285
          %s287 = smul.addr %s22, 8
          %s288 = sadd.s32 %s283, %s287
          %s289 = smul.addr %s288, 128
          %s290 = scalar_lea.hbm %s1, %s289
          %s291 = sshll.u32 %s279, 4
          %s292 = int_to_ptr.vmem [resolvable:$true] %s291
          %297 = dma.vmem_to_hbm [thread:$0]  %s292, 1024, %s290, %s276, 128, 128, 8
        $region32: #{pair_generation.1} parent=23 // pred_fallthru
          _
      $region24: #{pair_generation.1} parent=5 // pred_fallthru
        _
      %p298 = scmp.le.s32.totalorder 2, %s13
      // Predicated region
      $region33: #{pair_generation.1} parent=5 // pred_check
        %p299 = pneg %p298
      $region34: #{pair_generation.1} parent=5 // pred_check_branch
        %301 = sbr.rel (%p299) target = $region36
      $region35: #{pair_generation.1} parent=5 // pred_region
        %s302 = ssub.s32 %s13, 2
        // Predicated region
        $region37: #{pair_generation.1} parent=35 // pred_check
          %p303 = pneg %p82
        $region38: #{pair_generation.1} parent=35 // pred_check_branch
          %305 = sbr.rel (%p303) target = $region40
        $region39: #{pair_generation.1} parent=35 // pred_region
          %s306 = sand.u32 %s67, 1
          %s307 = scalar_lea.sflag [#allocation4], %s306
          %s308 = sand.u32 %s67, 1
          %s309 = smul.addr %s308, 64
          %s310 = scalar_lea.vmem [#allocation5], %s309
          %311 = dma.done %s307, 1024
        $region40: #{pair_generation.1} parent=35 // pred_fallthru
          _
      $region36: #{pair_generation.1} parent=5 // pred_fallthru
        _
    $region6: #{pair_generation.1} parent=1 // loop_footer
      %s17 = sadd.s32 1, %s13
    $region7: #{pair_generation.1} parent=1 // loop_footer_branch
      %12 = sbr.rel target = $region3
    $region8: #{pair_generation.1} parent=1 // loop_exit
      _
    %312 = vsyncpa [#allocation3], 1
    %s313 = scalar_lea.sflag [#allocation3], 1
    %314 = vsyncpa %s313, 1
    %315 = vsyncpa [#allocation4], 1
    %s316 = scalar_lea.sflag [#allocation4], 1
    %317 = vsyncpa %s316, 1

</llo_original>
